<compile_context>
chip_gen: v7x
topology: tpu7x:2x2x1
jax: 0.10.0
libtpu: 0.0.40
codegen_flags: <defaults>
</compile_context>

<pallas_src>
import functools

import jax
import jax.numpy as jnp
from jax.experimental import pallas as pl
from jax.experimental.pallas import tpu as pltpu


def _num_tensorcores():
    """Best-effort TensorCores-per-chip (2 on v7x, 1 on v5e/v6e)."""
    try:
        info = pltpu.get_tpu_info()
        for attr in ("tensorcores_per_chip", "num_tensorcores",
                     "tensor_core_count", "num_cores"):
            n = getattr(info, attr, None)
            if isinstance(n, int) and 1 <= n <= 8:
                return n
    except Exception:
        pass
    try:
        kind = jax.devices()[0].device_kind.lower()
        if "v7" in kind:
            return 2
    except Exception:
        pass
    return 1


def _supervision_stats_kernel(ref_ref, pred_ref, palpha_ref, acc_ref, *,
                              tile_h, tiles_per_core, h_img):
    """Accumulate 8 sufficient statistics as 8-sublane slabs into acc_ref (64, W).

    Slab s lives in rows [8*s, 8*s+8):
      0: m_sum                   1: sum(m*xl)       2: sum(m*yl)
      3: sum(m*xl^2)             4: sum(m*yl^2)     5: sum(m*xl*yl)
      6: sum BCE(fmax(pa,m), m)  7: sum BCE(fmax(1-pa,1-m), 1-m)
    """
    c = pl.program_id(0)
    t = pl.program_id(1)

    @pl.when(t == 0)
    def _():
        acc_ref[...] = jnp.zeros_like(acc_ref)

    w = ref_ref.shape[1]
    groups = tile_h // 8
    # Global row of this tile's first row, intentionally UNclamped so that the
    # partial last tile and any duplicated core-split tile (whose DMA block
    # index was clamped in the index_map) are fully masked out.
    row0 = (c * tiles_per_core + t) * tile_h
    interior = row0 + tile_h <= h_img

    def accumulate(masked):
        ref = ref_ref[...].astype(jnp.float32)
        pred = pred_ref[...].astype(jnp.float32)
        pa = palpha_ref[...].astype(jnp.float32)

        # ref_depth = clip(nan_to_num(ref, 0, 0, 0), 0, 10000)
        finite = jnp.isfinite(ref)
        if masked:
            rows = row0 + jax.lax.broadcasted_iota(jnp.int32, (tile_h, w), 0)
            row_valid = rows < h_img
            finite = jnp.logical_and(finite, row_valid)
            # Forces q -> 1 (l -> 0) on out-of-image rows below.
            pa = jnp.where(row_valid, pa, jnp.float32(0.0))
        ref = jnp.clip(jnp.where(finite, ref, jnp.float32(0.0)), 0.0, 10000.0)
        pa = jnp.clip(pa, 0.0, 1.0)

        m_bool = ref > 0.0
        m = m_bool.astype(jnp.float32)

        # Masked log depths: background / invalid pixels contribute exactly 0
        # to every statistic (the reference's 2*max(ref) background fill is
        # mathematically dead and dropped).
        xl = jnp.where(m_bool, jnp.log(ref + 1e-6), jnp.float32(0.0))
        yl = jnp.where(m_bool, jnp.log(jnp.maximum(pred, 0.0) + 1e-6),
                       jnp.float32(0.0))

        # Single-log BCE (valid because m in {0,1} and pa clipped to [0,1]):
        #   BCE(fmax(pa, m), m)        -> (1-m) * -clamp(log(1-pa), -100)
        #   BCE(fmax(1-pa, 1-m), 1-m)  ->    m  * -clamp(log(pa),   -100)
        q = jnp.where(m_bool, pa, 1.0 - pa)
        l = -jnp.maximum(jnp.log(q), -100.0)
        bce_a = (1.0 - m) * l
        bce_u = m * l

        def r8(v):
            # (tile_h, W) -> (8, W): pure VPU adds of sublane-aligned vregs.
            return jnp.sum(v.reshape(groups, 8, w), axis=0)

        def add(slab, v):
            sl = slice(8 * slab, 8 * slab + 8)
            acc_ref[sl, :] = acc_ref[sl, :] + r8(v)

        add(0, m)
        add(1, xl)
        add(2, yl)
        add(3, xl * xl)
        add(4, yl * yl)
        add(5, xl * yl)
        add(6, bce_a)
        add(7, bce_u)

    @pl.when(interior)
    def _():
        accumulate(masked=False)

    @pl.when(jnp.logical_not(interior))
    def _():
        accumulate(masked=True)


def supervision_losses(ref_depth, pred_depth, pred_alpha, *,
                       depth_weight=1.0, normal_weight=0.0,
                       alpha_weight=1.0, alpha_weight_under=0.1,
                       max_tile_h=None):
    """ref_depth, pred_depth, pred_alpha: (H, W, 1) arrays (as in the module)."""
    h, w = pred_depth.shape[0], pred_depth.shape[1]
    # (H, W, 1) -> (H, W): free metadata reshape. NO dtype cast here: casting
    # happens inside the kernel, so bf16/f16 inputs stream at native width.
    ref2 = ref_depth.reshape(h, w)
    pred2 = pred_depth.reshape(h, w)
    pa2 = pred_alpha.reshape(h, w)

    # Only pathologically small images (H < 8) need a row pad (tile_h must be
    # a multiple of 8 when it tiles H).  Real images never hit this branch.
    h_rows = h
    if h_rows < 8:
        pad = ((0, 8 - h_rows), (0, 0))
        ref2 = jnp.pad(ref2, pad)
        pred2 = jnp.pad(pred2, pad)
        pa2 = jnp.pad(pa2, pad)
        h_rows = 8

    # ~4 MiB per input buffer (3 inputs x 2 buffers + small output slab stays
    # well under the 48 MiB scoped-VMEM limit on all generations).
    max_isz = max(jnp.dtype(a.dtype).itemsize for a in (ref2, pred2, pa2))
    budget = 4 * 1024 * 1024
    tile_h = min(h_rows, max(8, budget // (w * max_isz)))
    tile_h = max(8, (tile_h // 8) * 8)
    if max_tile_h is not None:
        tile_h = max(8, min(tile_h, (max_tile_h // 8) * 8))
    n_tiles = int(pl.cdiv(h_rows, tile_h))

    n_cores = min(_num_tensorcores(), n_tiles)   # 1 on v5e/v6e, 2 on v7x
    tiles_per_core = int(pl.cdiv(n_tiles, n_cores))
    last_tile = n_tiles - 1

    def in_map(c, t):
        # Clamp so excess core-split cells never DMA out of bounds; their
        # contribution is zeroed by the in-kernel row mask (unclamped row0).
        return (jnp.minimum(c * tiles_per_core + t, last_tile), 0)

    kernel = functools.partial(
        _supervision_stats_kernel,
        tile_h=tile_h, tiles_per_core=tiles_per_core, h_img=h)

    in_bytes = h_rows * w * sum(jnp.dtype(a.dtype).itemsize
                                for a in (ref2, pred2, pa2))
    cost = pl.CostEstimate(flops=30 * h * w, transcendentals=3 * h * w,
                           bytes_accessed=int(in_bytes + n_cores * 64 * w * 4))

    partials = pl.pallas_call(
        kernel,
        out_shape=jax.ShapeDtypeStruct((n_cores, 64, w), jnp.float32),
        grid_spec=pltpu.PrefetchScalarGridSpec(
            num_scalar_prefetch=0,
            grid=(n_cores, tiles_per_core),
            in_specs=[pl.BlockSpec((tile_h, w), in_map)] * 3,
            out_specs=pl.BlockSpec((None, 64, w), lambda c, t: (c, 0, 0)),
        ),
        compiler_params=pltpu.CompilerParams(
            dimension_semantics=("parallel", "arbitrary"),
            vmem_limit_bytes=48 * 1024 * 1024),
        cost_estimate=cost,
    )(ref2, pred2, pa2)

    # Single tiny cross-core / sublane / lane reduction of the (n_cores, 64, W)
    # partial-statistics slab, then pure scalar finalize math.
    sums = jnp.sum(partials.reshape(n_cores, 8, 8, w), axis=(0, 2, 3))  # (8,)
    m_sum = sums[0]
    s_x, s_y, s_xx, s_yy, s_xy = sums[1], sums[2], sums[3], sums[4], sums[5]
    s_alpha, s_alpha_under = sums[6], sums[7]

    n = jnp.float32(h * w)
    # Guard degenerate cases (no valid depth pixels / zero variance); the
    # PyTorch original would produce NaN here.
    m_safe = jnp.maximum(m_sum, 1.0)
    mx = s_x / m_safe
    my = s_y / m_safe
    var_x = jnp.maximum(s_xx / m_safe - mx * mx, 0.0)
    var_y = jnp.maximum(s_yy / m_safe - my * my, 0.0)
    cov = s_xy / m_safe - mx * my
    denom = jnp.sqrt(var_x * var_y)
    corr = jnp.clip(jnp.where(denom > 0.0, cov / denom, jnp.float32(0.0)),
                    -1.0, 1.0)
    # mean(m * (xn - yn)^2) with xn, yn the mask-normalized log depths
    depth_loss = 2.0 * m_sum * (1.0 - corr) / n

    alpha_loss = s_alpha / n
    alpha_loss_under = s_alpha_under / n

    # TODO(synk): normal-supervision branch needs depth_to_normal + camera
    # model, and the depth_degree/uv_degree >= 0 polynomial distortion fit
    # needs a linear solve; only the normal_weight == 0 / log-depth path here.
    normal_loss = jnp.float32(0.0)

    return (jnp.float32(depth_weight) * depth_loss,
            jnp.float32(normal_weight) * normal_loss,
            jnp.float32(alpha_weight) * alpha_loss
            + jnp.float32(alpha_weight_under) * alpha_loss_under)


def _reference_losses(ref_depth, pred_depth, pred_alpha,
                      depth_weight, normal_weight, alpha_weight,
                      alpha_weight_under):
    """Pure-JAX transcription of the original two-pass PyTorch formulation."""
    h, w = pred_depth.shape[0], pred_depth.shape[1]
    rd = jnp.nan_to_num(ref_depth.reshape(h, w).astype(jnp.float32),
                        nan=0.0, posinf=0.0, neginf=0.0)
    rd = jnp.clip(rd, 0.0, 10000.0)
    alpha_b = rd > 0.0
    rd = jnp.where(alpha_b, rd, 2.0 * jnp.max(rd))
    m = alpha_b.astype(jnp.float32)
    m_sum = jnp.sum(m)
    x = jnp.log(jnp.maximum(rd, 0.0) + 1e-6)
    y = jnp.log(jnp.maximum(pred_depth.reshape(h, w).astype(jnp.float32),
                            0.0) + 1e-6)
    x = x - jnp.sum(x * m) / m_sum
    y = y - jnp.sum(y * m) / m_sum
    x = x / jnp.sqrt(jnp.sum(x * x * m) / m_sum)
    y = y / jnp.sqrt(jnp.sum(y * y * m) / m_sum)
    depth_loss = jnp.mean((x - y) ** 2 * m)

    pa = pred_alpha.reshape(h, w).astype(jnp.float32)

    def bce(p, t):
        return jnp.mean(-(t * jnp.maximum(jnp.log(p), -100.0)
                          + (1.0 - t) * jnp.maximum(jnp.log(1.0 - p), -100.0)))

    alpha_loss = bce(jnp.maximum(pa, m), m)
    alpha_loss_under = bce(jnp.maximum(1.0 - pa, 1.0 - m), 1.0 - m)
    return (depth_weight * depth_loss,
            normal_weight * 0.0,
            alpha_weight * alpha_loss + alpha_weight_under * alpha_loss_under)


if __name__ == "__main__":
    key = jax.random.PRNGKey(0)
    k1, k2, k3 = jax.random.split(key, 3)
    # Small, deliberately awkward shape: H not a multiple of the tile height
    # (exercises the masked tail tile and, on 2-TC chips, the clamped
    # duplicate tile), W not a multiple of 128 (full-width block).
    h, w = 43, 48

    ref_depth = jax.random.uniform(k1, (h, w, 1), minval=0.5, maxval=5.0,
                                   dtype=jnp.float32)
    ref_depth = ref_depth.at[:3, :5, 0].set(0.0)      # invalid-depth pixels
    ref_depth = ref_depth.at[7, 9, 0].set(jnp.nan)    # exercise nan_to_num
    ref_depth = ref_depth.at[20, 3, 0].set(jnp.inf)

    pred_depth = jax.random.uniform(k2, (h, w, 1), minval=0.5, maxval=5.0,
                                    dtype=jnp.float32)
    pred_alpha = jax.random.uniform(k3, (h, w, 1), minval=0.01, maxval=0.99,
                                    dtype=jnp.float32)

    out = supervision_losses(ref_depth, pred_depth, pred_alpha,
                             depth_weight=1.0, normal_weight=0.0,
                             alpha_weight=1.0, alpha_weight_under=0.1,
                             max_tile_h=16)   # force multi-tile path at test size
    out = jax.block_until_ready(out)

    ref_out = _reference_losses(ref_depth, pred_depth, pred_alpha,
                                1.0, 0.0, 1.0, 0.1)
    for got, want in zip(out, ref_out):
        if not bool(jnp.allclose(got, want, rtol=2e-3, atol=1e-5)):
            raise AssertionError(f"mismatch: kernel={got} ref={want}")

    print("KERNEL_OK")
</pallas_src>

<mosaic_0001>
module attributes {stable_mosaic.version = 11 : i64} {
  func.func @_supervision_stats_kernel(%arg0: i32, %arg1: i32, %arg2: memref<16x48xf32, #tpu.memory_space<vmem>>, %arg3: memref<16x48xf32, #tpu.memory_space<vmem>>, %arg4: memref<16x48xf32, #tpu.memory_space<vmem>>, %arg5: memref<1x64x48xf32, #tpu.memory_space<vmem>>) attributes {dimension_semantics = [#tpu.dimension_semantics<parallel>, #tpu.dimension_semantics<arbitrary>], iteration_bounds = array<i64: 1, 3>, scalar_prefetch = 0 : i64, scratch_operands = 0 : i64, tpu.core_type = #tpu.core_type<tc>, window_params = [{transform_indices = @transform_0, window_bounds = array<i64: 16, 48>}, {transform_indices = @transform_1, window_bounds = array<i64: 16, 48>}, {transform_indices = @transform_2, window_bounds = array<i64: 16, 48>}, {transform_indices = @transform_3, window_bounds = array<i64: 1, 64, 48>}]} {
    %c0_i32 = arith.constant 0 : i32
    %0 = arith.cmpi eq, %arg1, %c0_i32 : i32
    %1 = arith.extui %0 : i1 to i32
    %c0_i32_0 = arith.constant 0 : i32
    %2 = arith.cmpi ne, %1, %c0_i32_0 : i32
    scf.if %2 {
      %cst = arith.constant 0.000000e+00 : f32
      %13 = vector.broadcast %cst : f32 to vector<64x48xf32>
      %c0 = arith.constant 0 : index
      %c0_4 = arith.constant 0 : index
      %c0_5 = arith.constant 0 : index
      %14 = vector.load %arg5[%c0, %c0_4, %c0_5] : memref<1x64x48xf32, #tpu.memory_space<vmem>>, vector<1x64x48xf32>
      %15 = vector.shape_cast %14 : vector<1x64x48xf32> to vector<64x48xf32>
      %16 = vector.shape_cast %13 : vector<64x48xf32> to vector<1x64x48xf32>
      tpu.vector_store %arg5[%c0, %c0_4, %c0_5], %16 {strides = array<i32>} : memref<1x64x48xf32, #tpu.memory_space<vmem>>, vector<1x64x48xf32>,
    } else {
    }
    %c3_i32 = arith.constant 3 : i32
    %3 = arith.muli %arg0, %c3_i32 : i32
    %4 = arith.addi %3, %arg1 : i32
    %c16_i32 = arith.constant 16 : i32
    %5 = arith.muli %4, %c16_i32 : i32
    %c16_i32_1 = arith.constant 16 : i32
    %6 = arith.addi %5, %c16_i32_1 : i32
    %c43_i32 = arith.constant 43 : i32
    %7 = arith.cmpi sle, %6, %c43_i32 : i32
    %8 = arith.extui %7 : i1 to i32
    %c0_i32_2 = arith.constant 0 : i32
    %9 = arith.cmpi ne, %8, %c0_i32_2 : i32
    scf.if %9 {
      %c0 = arith.constant 0 : index
      %c0_4 = arith.constant 0 : index
      %13 = vector.load %arg2[%c0, %c0_4] : memref<16x48xf32, #tpu.memory_space<vmem>>, vector<16x48xf32>
      %c0_5 = arith.constant 0 : index
      %c0_6 = arith.constant 0 : index
      %14 = vector.load %arg3[%c0_5, %c0_6] : memref<16x48xf32, #tpu.memory_space<vmem>>, vector<16x48xf32>
      %c0_7 = arith.constant 0 : index
      %c0_8 = arith.constant 0 : index
      %15 = vector.load %arg4[%c0_7, %c0_8] : memref<16x48xf32, #tpu.memory_space<vmem>>, vector<16x48xf32>
      %16 = tpu.weird %13 : vector<16x48xf32> -> vector<16x48xi1>
      %cst = arith.constant dense<true> : vector<16x48xi1>
      %17 = arith.xori %16, %cst : vector<16x48xi1>
      %cst_9 = arith.constant 0.000000e+00 : f32
      %18 = vector.broadcast %cst_9 : f32 to vector<16x48xf32>
      %19 = arith.select %17, %13, %18 : vector<16x48xi1>, vector<16x48xf32>
      %cst_10 = arith.constant 0.000000e+00 : f32
      %cst_11 = arith.constant 1.000000e+04 : f32
      %20 = vector.broadcast %cst_10 : f32 to vector<16x48xf32>
      %21 = arith.maximumf %20, %19 : vector<16x48xf32>
      %22 = vector.broadcast %cst_11 : f32 to vector<16x48xf32>
      %23 = arith.minimumf %22, %21 : vector<16x48xf32>
      %cst_12 = arith.constant 0.000000e+00 : f32
      %cst_13 = arith.constant 1.000000e+00 : f32
      %24 = vector.broadcast %cst_12 : f32 to vector<16x48xf32>
      %25 = arith.maximumf %24, %15 : vector<16x48xf32>
      %26 = vector.broadcast %cst_13 : f32 to vector<16x48xf32>
      %27 = arith.minimumf %26, %25 : vector<16x48xf32>
      %cst_14 = arith.constant 0.000000e+00 : f32
      %28 = vector.broadcast %cst_14 : f32 to vector<16x48xf32>
      %29 = arith.cmpf ogt, %23, %28 : vector<16x48xf32>
      %30 = arith.extui %29 : vector<16x48xi1> to vector<16x48xi32>
      %31 = arith.sitofp %30 : vector<16x48xi32> to vector<16x48xf32>
      %cst_15 = arith.constant 9.99999997E-7 : f32
      %32 = vector.broadcast %cst_15 : f32 to vector<16x48xf32>
      %33 = arith.addf %23, %32 : vector<16x48xf32>
      %34 = math.log %33 : vector<16x48xf32>
      %cst_16 = arith.constant 0.000000e+00 : f32
      %35 = vector.broadcast %cst_16 : f32 to vector<16x48xf32>
      %36 = arith.select %29, %34, %35 : vector<16x48xi1>, vector<16x48xf32>
      %cst_17 = arith.constant 0.000000e+00 : f32
      %37 = vector.broadcast %cst_17 : f32 to vector<16x48xf32>
      %38 = arith.maximumf %14, %37 : vector<16x48xf32>
      %cst_18 = arith.constant 9.99999997E-7 : f32
      %39 = vector.broadcast %cst_18 : f32 to vector<16x48xf32>
      %40 = arith.addf %38, %39 : vector<16x48xf32>
      %41 = math.log %40 : vector<16x48xf32>
      %cst_19 = arith.constant 0.000000e+00 : f32
      %42 = vector.broadcast %cst_19 : f32 to vector<16x48xf32>
      %43 = arith.select %29, %41, %42 : vector<16x48xi1>, vector<16x48xf32>
      %cst_20 = arith.constant 1.000000e+00 : f32
      %44 = vector.broadcast %cst_20 : f32 to vector<16x48xf32>
      %45 = arith.subf %44, %27 : vector<16x48xf32>
      %46 = arith.select %29, %27, %45 : vector<16x48xi1>, vector<16x48xf32>
      %47 = math.log %46 : vector<16x48xf32>
      %cst_21 = arith.constant -1.000000e+02 : f32
      %48 = vector.broadcast %cst_21 : f32 to vector<16x48xf32>
      %49 = arith.maximumf %47, %48 : vector<16x48xf32>
      %cst_22 = arith.constant 0.000000e+00 : f32
      %50 = vector.broadcast %cst_22 : f32 to vector<16x48xf32>
      %51 = arith.subf %50, %49 : vector<16x48xf32>
      %cst_23 = arith.constant 1.000000e+00 : f32
      %52 = vector.broadcast %cst_23 : f32 to vector<16x48xf32>
      %53 = arith.subf %52, %31 : vector<16x48xf32>
      %54 = arith.mulf %53, %51 : vector<16x48xf32>
      %55 = arith.mulf %31, %51 : vector<16x48xf32>
      %c0_24 = arith.constant 0 : index
      %c0_25 = arith.constant 0 : index
      %c0_26 = arith.constant 0 : index
      %56 = vector.load %arg5[%c0_24, %c0_25, %c0_26] : memref<1x64x48xf32, #tpu.memory_space<vmem>>, vector<1x8x48xf32>
      %57 = vector.shape_cast %56 : vector<1x8x48xf32> to vector<8x48xf32>
      %58 = vector.shape_cast %31 : vector<16x48xf32> to vector<2x8x48xf32>
      %cst_27 = arith.constant dense<0.000000e+00> : vector<8x48xf32>
      %59 = vector.multi_reduction <add>, %58, %cst_27 [0] : vector<2x8x48xf32> to vector<8x48xf32>
      %60 = arith.addf %57, %59 : vector<8x48xf32>
      %c0_28 = arith.constant 0 : index
      %c0_29 = arith.constant 0 : index
      %c0_30 = arith.constant 0 : index
      %61 = vector.load %arg5[%c0_28, %c0_29, %c0_30] : memref<1x64x48xf32, #tpu.memory_space<vmem>>, vector<1x8x48xf32>
      %62 = vector.shape_cast %61 : vector<1x8x48xf32> to vector<8x48xf32>
      %63 = vector.shape_cast %60 : vector<8x48xf32> to vector<1x8x48xf32>
      tpu.vector_store %arg5[%c0_28, %c0_29, %c0_30], %63 {strides = array<i32>} : memref<1x64x48xf32, #tpu.memory_space<vmem>>, vector<1x8x48xf32>,
      %c0_31 = arith.constant 0 : index
      %c8 = arith.constant 8 : index
      %c0_32 = arith.constant 0 : index
      %64 = vector.load %arg5[%c0_31, %c8, %c0_32] : memref<1x64x48xf32, #tpu.memory_space<vmem>>, vector<1x8x48xf32>
      %65 = vector.shape_cast %64 : vector<1x8x48xf32> to vector<8x48xf32>
      %66 = vector.shape_cast %36 : vector<16x48xf32> to vector<2x8x48xf32>
      %cst_33 = arith.constant dense<0.000000e+00> : vector<8x48xf32>
      %67 = vector.multi_reduction <add>, %66, %cst_33 [0] : vector<2x8x48xf32> to vector<8x48xf32>
      %68 = arith.addf %65, %67 : vector<8x48xf32>
      %c0_34 = arith.constant 0 : index
      %c8_35 = arith.constant 8 : index
      %c0_36 = arith.constant 0 : index
      %69 = vector.load %arg5[%c0_34, %c8_35, %c0_36] : memref<1x64x48xf32, #tpu.memory_space<vmem>>, vector<1x8x48xf32>
      %70 = vector.shape_cast %69 : vector<1x8x48xf32> to vector<8x48xf32>
      %71 = vector.shape_cast %68 : vector<8x48xf32> to vector<1x8x48xf32>
      tpu.vector_store %arg5[%c0_34, %c8_35, %c0_36], %71 {strides = array<i32>} : memref<1x64x48xf32, #tpu.memory_space<vmem>>, vector<1x8x48xf32>,
      %c0_37 = arith.constant 0 : index
      %c16 = arith.constant 16 : index
      %c0_38 = arith.constant 0 : index
      %72 = vector.load %arg5[%c0_37, %c16, %c0_38] : memref<1x64x48xf32, #tpu.memory_space<vmem>>, vector<1x8x48xf32>
      %73 = vector.shape_cast %72 : vector<1x8x48xf32> to vector<8x48xf32>
      %74 = vector.shape_cast %43 : vector<16x48xf32> to vector<2x8x48xf32>
      %cst_39 = arith.constant dense<0.000000e+00> : vector<8x48xf32>
      %75 = vector.multi_reduction <add>, %74, %cst_39 [0] : vector<2x8x48xf32> to vector<8x48xf32>
      %76 = arith.addf %73, %75 : vector<8x48xf32>
      %c0_40 = arith.constant 0 : index
      %c16_41 = arith.constant 16 : index
      %c0_42 = arith.constant 0 : index
      %77 = vector.load %arg5[%c0_40, %c16_41, %c0_42] : memref<1x64x48xf32, #tpu.memory_space<vmem>>, vector<1x8x48xf32>
      %78 = vector.shape_cast %77 : vector<1x8x48xf32> to vector<8x48xf32>
      %79 = vector.shape_cast %76 : vector<8x48xf32> to vector<1x8x48xf32>
      tpu.vector_store %arg5[%c0_40, %c16_41, %c0_42], %79 {strides = array<i32>} : memref<1x64x48xf32, #tpu.memory_space<vmem>>, vector<1x8x48xf32>,
      %80 = arith.mulf %36, %36 : vector<16x48xf32>
      %c0_43 = arith.constant 0 : index
      %c24 = arith.constant 24 : index
      %c0_44 = arith.constant 0 : index
      %81 = vector.load %arg5[%c0_43, %c24, %c0_44] : memref<1x64x48xf32, #tpu.memory_space<vmem>>, vector<1x8x48xf32>
      %82 = vector.shape_cast %81 : vector<1x8x48xf32> to vector<8x48xf32>
      %83 = vector.shape_cast %80 : vector<16x48xf32> to vector<2x8x48xf32>
      %cst_45 = arith.constant dense<0.000000e+00> : vector<8x48xf32>
      %84 = vector.multi_reduction <add>, %83, %cst_45 [0] : vector<2x8x48xf32> to vector<8x48xf32>
      %85 = arith.addf %82, %84 : vector<8x48xf32>
      %c0_46 = arith.constant 0 : index
      %c24_47 = arith.constant 24 : index
      %c0_48 = arith.constant 0 : index
      %86 = vector.load %arg5[%c0_46, %c24_47, %c0_48] : memref<1x64x48xf32, #tpu.memory_space<vmem>>, vector<1x8x48xf32>
      %87 = vector.shape_cast %86 : vector<1x8x48xf32> to vector<8x48xf32>
      %88 = vector.shape_cast %85 : vector<8x48xf32> to vector<1x8x48xf32>
      tpu.vector_store %arg5[%c0_46, %c24_47, %c0_48], %88 {strides = array<i32>} : memref<1x64x48xf32, #tpu.memory_space<vmem>>, vector<1x8x48xf32>,
      %89 = arith.mulf %43, %43 : vector<16x48xf32>
      %c0_49 = arith.constant 0 : index
      %c32 = arith.constant 32 : index
      %c0_50 = arith.constant 0 : index
      %90 = vector.load %arg5[%c0_49, %c32, %c0_50] : memref<1x64x48xf32, #tpu.memory_space<vmem>>, vector<1x8x48xf32>
      %91 = vector.shape_cast %90 : vector<1x8x48xf32> to vector<8x48xf32>
      %92 = vector.shape_cast %89 : vector<16x48xf32> to vector<2x8x48xf32>
      %cst_51 = arith.constant dense<0.000000e+00> : vector<8x48xf32>
      %93 = vector.multi_reduction <add>, %92, %cst_51 [0] : vector<2x8x48xf32> to vector<8x48xf32>
      %94 = arith.addf %91, %93 : vector<8x48xf32>
      %c0_52 = arith.constant 0 : index
      %c32_53 = arith.constant 32 : index
      %c0_54 = arith.constant 0 : index
      %95 = vector.load %arg5[%c0_52, %c32_53, %c0_54] : memref<1x64x48xf32, #tpu.memory_space<vmem>>, vector<1x8x48xf32>
      %96 = vector.shape_cast %95 : vector<1x8x48xf32> to vector<8x48xf32>
      %97 = vector.shape_cast %94 : vector<8x48xf32> to vector<1x8x48xf32>
      tpu.vector_store %arg5[%c0_52, %c32_53, %c0_54], %97 {strides = array<i32>} : memref<1x64x48xf32, #tpu.memory_space<vmem>>, vector<1x8x48xf32>,
      %98 = arith.mulf %36, %43 : vector<16x48xf32>
      %c0_55 = arith.constant 0 : index
      %c40 = arith.constant 40 : index
      %c0_56 = arith.constant 0 : index
      %99 = vector.load %arg5[%c0_55, %c40, %c0_56] : memref<1x64x48xf32, #tpu.memory_space<vmem>>, vector<1x8x48xf32>
      %100 = vector.shape_cast %99 : vector<1x8x48xf32> to vector<8x48xf32>
      %101 = vector.shape_cast %98 : vector<16x48xf32> to vector<2x8x48xf32>
      %cst_57 = arith.constant dense<0.000000e+00> : vector<8x48xf32>
      %102 = vector.multi_reduction <add>, %101, %cst_57 [0] : vector<2x8x48xf32> to vector<8x48xf32>
      %103 = arith.addf %100, %102 : vector<8x48xf32>
      %c0_58 = arith.constant 0 : index
      %c40_59 = arith.constant 40 : index
      %c0_60 = arith.constant 0 : index
      %104 = vector.load %arg5[%c0_58, %c40_59, %c0_60] : memref<1x64x48xf32, #tpu.memory_space<vmem>>, vector<1x8x48xf32>
      %105 = vector.shape_cast %104 : vector<1x8x48xf32> to vector<8x48xf32>
      %106 = vector.shape_cast %103 : vector<8x48xf32> to vector<1x8x48xf32>
      tpu.vector_store %arg5[%c0_58, %c40_59, %c0_60], %106 {strides = array<i32>} : memref<1x64x48xf32, #tpu.memory_space<vmem>>, vector<1x8x48xf32>,
      %c0_61 = arith.constant 0 : index
      %c48 = arith.constant 48 : index
      %c0_62 = arith.constant 0 : index
      %107 = vector.load %arg5[%c0_61, %c48, %c0_62] : memref<1x64x48xf32, #tpu.memory_space<vmem>>, vector<1x8x48xf32>
      %108 = vector.shape_cast %107 : vector<1x8x48xf32> to vector<8x48xf32>
      %109 = vector.shape_cast %54 : vector<16x48xf32> to vector<2x8x48xf32>
      %cst_63 = arith.constant dense<0.000000e+00> : vector<8x48xf32>
      %110 = vector.multi_reduction <add>, %109, %cst_63 [0] : vector<2x8x48xf32> to vector<8x48xf32>
      %111 = arith.addf %108, %110 : vector<8x48xf32>
      %c0_64 = arith.constant 0 : index
      %c48_65 = arith.constant 48 : index
      %c0_66 = arith.constant 0 : index
      %112 = vector.load %arg5[%c0_64, %c48_65, %c0_66] : memref<1x64x48xf32, #tpu.memory_space<vmem>>, vector<1x8x48xf32>
      %113 = vector.shape_cast %112 : vector<1x8x48xf32> to vector<8x48xf32>
      %114 = vector.shape_cast %111 : vector<8x48xf32> to vector<1x8x48xf32>
      tpu.vector_store %arg5[%c0_64, %c48_65, %c0_66], %114 {strides = array<i32>} : memref<1x64x48xf32, #tpu.memory_space<vmem>>, vector<1x8x48xf32>,
      %c0_67 = arith.constant 0 : index
      %c56 = arith.constant 56 : index
      %c0_68 = arith.constant 0 : index
      %115 = vector.load %arg5[%c0_67, %c56, %c0_68] : memref<1x64x48xf32, #tpu.memory_space<vmem>>, vector<1x8x48xf32>
      %116 = vector.shape_cast %115 : vector<1x8x48xf32> to vector<8x48xf32>
      %117 = vector.shape_cast %55 : vector<16x48xf32> to vector<2x8x48xf32>
      %cst_69 = arith.constant dense<0.000000e+00> : vector<8x48xf32>
      %118 = vector.multi_reduction <add>, %117, %cst_69 [0] : vector<2x8x48xf32> to vector<8x48xf32>
      %119 = arith.addf %116, %118 : vector<8x48xf32>
      %c0_70 = arith.constant 0 : index
      %c56_71 = arith.constant 56 : index
      %c0_72 = arith.constant 0 : index
      %120 = vector.load %arg5[%c0_70, %c56_71, %c0_72] : memref<1x64x48xf32, #tpu.memory_space<vmem>>, vector<1x8x48xf32>
      %121 = vector.shape_cast %120 : vector<1x8x48xf32> to vector<8x48xf32>
      %122 = vector.shape_cast %119 : vector<8x48xf32> to vector<1x8x48xf32>
      tpu.vector_store %arg5[%c0_70, %c56_71, %c0_72], %122 {strides = array<i32>} : memref<1x64x48xf32, #tpu.memory_space<vmem>>, vector<1x8x48xf32>,
    } else {
    }
    %true = arith.constant true
    %10 = arith.xori %7, %true : i1
    %11 = arith.extui %10 : i1 to i32
    %c0_i32_3 = arith.constant 0 : i32
    %12 = arith.cmpi ne, %11, %c0_i32_3 : i32
    scf.if %12 {
      %c0 = arith.constant 0 : index
      %c0_4 = arith.constant 0 : index
      %13 = vector.load %arg2[%c0, %c0_4] : memref<16x48xf32, #tpu.memory_space<vmem>>, vector<16x48xf32>
      %c0_5 = arith.constant 0 : index
      %c0_6 = arith.constant 0 : index
      %14 = vector.load %arg3[%c0_5, %c0_6] : memref<16x48xf32, #tpu.memory_space<vmem>>, vector<16x48xf32>
      %c0_7 = arith.constant 0 : index
      %c0_8 = arith.constant 0 : index
      %15 = vector.load %arg4[%c0_7, %c0_8] : memref<16x48xf32, #tpu.memory_space<vmem>>, vector<16x48xf32>
      %16 = tpu.weird %13 : vector<16x48xf32> -> vector<16x48xi1>
      %cst = arith.constant dense<true> : vector<16x48xi1>
      %17 = arith.xori %16, %cst : vector<16x48xi1>
      %18 = tpu.iota {dimensions = array<i32: 0>} : vector<16x48xi32>
      %19 = vector.broadcast %5 : i32 to vector<16x48xi32>
      %20 = arith.addi %19, %18 : vector<16x48xi32>
      %c43_i32_9 = arith.constant 43 : i32
      %21 = vector.broadcast %c43_i32_9 : i32 to vector<16x48xi32>
      %22 = arith.cmpi slt, %20, %21 : vector<16x48xi32>
      %23 = arith.andi %17, %22 : vector<16x48xi1>
      %cst_10 = arith.constant 0.000000e+00 : f32
      %24 = vector.broadcast %cst_10 : f32 to vector<16x48xf32>
      %25 = arith.select %22, %15, %24 : vector<16x48xi1>, vector<16x48xf32>
      %cst_11 = arith.constant 0.000000e+00 : f32
      %26 = vector.broadcast %cst_11 : f32 to vector<16x48xf32>
      %27 = arith.select %23, %13, %26 : vector<16x48xi1>, vector<16x48xf32>
      %cst_12 = arith.constant 0.000000e+00 : f32
      %cst_13 = arith.constant 1.000000e+04 : f32
      %28 = vector.broadcast %cst_12 : f32 to vector<16x48xf32>
      %29 = arith.maximumf %28, %27 : vector<16x48xf32>
      %30 = vector.broadcast %cst_13 : f32 to vector<16x48xf32>
      %31 = arith.minimumf %30, %29 : vector<16x48xf32>
      %cst_14 = arith.constant 0.000000e+00 : f32
      %cst_15 = arith.constant 1.000000e+00 : f32
      %32 = vector.broadcast %cst_14 : f32 to vector<16x48xf32>
      %33 = arith.maximumf %32, %25 : vector<16x48xf32>
      %34 = vector.broadcast %cst_15 : f32 to vector<16x48xf32>
      %35 = arith.minimumf %34, %33 : vector<16x48xf32>
      %cst_16 = arith.constant 0.000000e+00 : f32
      %36 = vector.broadcast %cst_16 : f32 to vector<16x48xf32>
      %37 = arith.cmpf ogt, %31, %36 : vector<16x48xf32>
      %38 = arith.extui %37 : vector<16x48xi1> to vector<16x48xi32>
      %39 = arith.sitofp %38 : vector<16x48xi32> to vector<16x48xf32>
      %cst_17 = arith.constant 9.99999997E-7 : f32
      %40 = vector.broadcast %cst_17 : f32 to vector<16x48xf32>
      %41 = arith.addf %31, %40 : vector<16x48xf32>
      %42 = math.log %41 : vector<16x48xf32>
      %cst_18 = arith.constant 0.000000e+00 : f32
      %43 = vector.broadcast %cst_18 : f32 to vector<16x48xf32>
      %44 = arith.select %37, %42, %43 : vector<16x48xi1>, vector<16x48xf32>
      %cst_19 = arith.constant 0.000000e+00 : f32
      %45 = vector.broadcast %cst_19 : f32 to vector<16x48xf32>
      %46 = arith.maximumf %14, %45 : vector<16x48xf32>
      %cst_20 = arith.constant 9.99999997E-7 : f32
      %47 = vector.broadcast %cst_20 : f32 to vector<16x48xf32>
      %48 = arith.addf %46, %47 : vector<16x48xf32>
      %49 = math.log %48 : vector<16x48xf32>
      %cst_21 = arith.constant 0.000000e+00 : f32
      %50 = vector.broadcast %cst_21 : f32 to vector<16x48xf32>
      %51 = arith.select %37, %49, %50 : vector<16x48xi1>, vector<16x48xf32>
      %cst_22 = arith.constant 1.000000e+00 : f32
      %52 = vector.broadcast %cst_22 : f32 to vector<16x48xf32>
      %53 = arith.subf %52, %35 : vector<16x48xf32>
      %54 = arith.select %37, %35, %53 : vector<16x48xi1>, vector<16x48xf32>
      %55 = math.log %54 : vector<16x48xf32>
      %cst_23 = arith.constant -1.000000e+02 : f32
      %56 = vector.broadcast %cst_23 : f32 to vector<16x48xf32>
      %57 = arith.maximumf %55, %56 : vector<16x48xf32>
      %cst_24 = arith.constant 0.000000e+00 : f32
      %58 = vector.broadcast %cst_24 : f32 to vector<16x48xf32>
      %59 = arith.subf %58, %57 : vector<16x48xf32>
      %cst_25 = arith.constant 1.000000e+00 : f32
      %60 = vector.broadcast %cst_25 : f32 to vector<16x48xf32>
      %61 = arith.subf %60, %39 : vector<16x48xf32>
      %62 = arith.mulf %61, %59 : vector<16x48xf32>
      %63 = arith.mulf %39, %59 : vector<16x48xf32>
      %c0_26 = arith.constant 0 : index
      %c0_27 = arith.constant 0 : index
      %c0_28 = arith.constant 0 : index
      %64 = vector.load %arg5[%c0_26, %c0_27, %c0_28] : memref<1x64x48xf32, #tpu.memory_space<vmem>>, vector<1x8x48xf32>
      %65 = vector.shape_cast %64 : vector<1x8x48xf32> to vector<8x48xf32>
      %66 = vector.shape_cast %39 : vector<16x48xf32> to vector<2x8x48xf32>
      %cst_29 = arith.constant dense<0.000000e+00> : vector<8x48xf32>
      %67 = vector.multi_reduction <add>, %66, %cst_29 [0] : vector<2x8x48xf32> to vector<8x48xf32>
      %68 = arith.addf %65, %67 : vector<8x48xf32>
      %c0_30 = arith.constant 0 : index
      %c0_31 = arith.constant 0 : index
      %c0_32 = arith.constant 0 : index
      %69 = vector.load %arg5[%c0_30, %c0_31, %c0_32] : memref<1x64x48xf32, #tpu.memory_space<vmem>>, vector<1x8x48xf32>
      %70 = vector.shape_cast %69 : vector<1x8x48xf32> to vector<8x48xf32>
      %71 = vector.shape_cast %68 : vector<8x48xf32> to vector<1x8x48xf32>
      tpu.vector_store %arg5[%c0_30, %c0_31, %c0_32], %71 {strides = array<i32>} : memref<1x64x48xf32, #tpu.memory_space<vmem>>, vector<1x8x48xf32>,
      %c0_33 = arith.constant 0 : index
      %c8 = arith.constant 8 : index
      %c0_34 = arith.constant 0 : index
      %72 = vector.load %arg5[%c0_33, %c8, %c0_34] : memref<1x64x48xf32, #tpu.memory_space<vmem>>, vector<1x8x48xf32>
      %73 = vector.shape_cast %72 : vector<1x8x48xf32> to vector<8x48xf32>
      %74 = vector.shape_cast %44 : vector<16x48xf32> to vector<2x8x48xf32>
      %cst_35 = arith.constant dense<0.000000e+00> : vector<8x48xf32>
      %75 = vector.multi_reduction <add>, %74, %cst_35 [0] : vector<2x8x48xf32> to vector<8x48xf32>
      %76 = arith.addf %73, %75 : vector<8x48xf32>
      %c0_36 = arith.constant 0 : index
      %c8_37 = arith.constant 8 : index
      %c0_38 = arith.constant 0 : index
      %77 = vector.load %arg5[%c0_36, %c8_37, %c0_38] : memref<1x64x48xf32, #tpu.memory_space<vmem>>, vector<1x8x48xf32>
      %78 = vector.shape_cast %77 : vector<1x8x48xf32> to vector<8x48xf32>
      %79 = vector.shape_cast %76 : vector<8x48xf32> to vector<1x8x48xf32>
      tpu.vector_store %arg5[%c0_36, %c8_37, %c0_38], %79 {strides = array<i32>} : memref<1x64x48xf32, #tpu.memory_space<vmem>>, vector<1x8x48xf32>,
      %c0_39 = arith.constant 0 : index
      %c16 = arith.constant 16 : index
      %c0_40 = arith.constant 0 : index
      %80 = vector.load %arg5[%c0_39, %c16, %c0_40] : memref<1x64x48xf32, #tpu.memory_space<vmem>>, vector<1x8x48xf32>
      %81 = vector.shape_cast %80 : vector<1x8x48xf32> to vector<8x48xf32>
      %82 = vector.shape_cast %51 : vector<16x48xf32> to vector<2x8x48xf32>
      %cst_41 = arith.constant dense<0.000000e+00> : vector<8x48xf32>
      %83 = vector.multi_reduction <add>, %82, %cst_41 [0] : vector<2x8x48xf32> to vector<8x48xf32>
      %84 = arith.addf %81, %83 : vector<8x48xf32>
      %c0_42 = arith.constant 0 : index
      %c16_43 = arith.constant 16 : index
      %c0_44 = arith.constant 0 : index
      %85 = vector.load %arg5[%c0_42, %c16_43, %c0_44] : memref<1x64x48xf32, #tpu.memory_space<vmem>>, vector<1x8x48xf32>
      %86 = vector.shape_cast %85 : vector<1x8x48xf32> to vector<8x48xf32>
      %87 = vector.shape_cast %84 : vector<8x48xf32> to vector<1x8x48xf32>
      tpu.vector_store %arg5[%c0_42, %c16_43, %c0_44], %87 {strides = array<i32>} : memref<1x64x48xf32, #tpu.memory_space<vmem>>, vector<1x8x48xf32>,
      %88 = arith.mulf %44, %44 : vector<16x48xf32>
      %c0_45 = arith.constant 0 : index
      %c24 = arith.constant 24 : index
      %c0_46 = arith.constant 0 : index
      %89 = vector.load %arg5[%c0_45, %c24, %c0_46] : memref<1x64x48xf32, #tpu.memory_space<vmem>>, vector<1x8x48xf32>
      %90 = vector.shape_cast %89 : vector<1x8x48xf32> to vector<8x48xf32>
      %91 = vector.shape_cast %88 : vector<16x48xf32> to vector<2x8x48xf32>
      %cst_47 = arith.constant dense<0.000000e+00> : vector<8x48xf32>
      %92 = vector.multi_reduction <add>, %91, %cst_47 [0] : vector<2x8x48xf32> to vector<8x48xf32>
      %93 = arith.addf %90, %92 : vector<8x48xf32>
      %c0_48 = arith.constant 0 : index
      %c24_49 = arith.constant 24 : index
      %c0_50 = arith.constant 0 : index
      %94 = vector.load %arg5[%c0_48, %c24_49, %c0_50] : memref<1x64x48xf32, #tpu.memory_space<vmem>>, vector<1x8x48xf32>
      %95 = vector.shape_cast %94 : vector<1x8x48xf32> to vector<8x48xf32>
      %96 = vector.shape_cast %93 : vector<8x48xf32> to vector<1x8x48xf32>
      tpu.vector_store %arg5[%c0_48, %c24_49, %c0_50], %96 {strides = array<i32>} : memref<1x64x48xf32, #tpu.memory_space<vmem>>, vector<1x8x48xf32>,
      %97 = arith.mulf %51, %51 : vector<16x48xf32>
      %c0_51 = arith.constant 0 : index
      %c32 = arith.constant 32 : index
      %c0_52 = arith.constant 0 : index
      %98 = vector.load %arg5[%c0_51, %c32, %c0_52] : memref<1x64x48xf32, #tpu.memory_space<vmem>>, vector<1x8x48xf32>
      %99 = vector.shape_cast %98 : vector<1x8x48xf32> to vector<8x48xf32>
      %100 = vector.shape_cast %97 : vector<16x48xf32> to vector<2x8x48xf32>
      %cst_53 = arith.constant dense<0.000000e+00> : vector<8x48xf32>
      %101 = vector.multi_reduction <add>, %100, %cst_53 [0] : vector<2x8x48xf32> to vector<8x48xf32>
      %102 = arith.addf %99, %101 : vector<8x48xf32>
      %c0_54 = arith.constant 0 : index
      %c32_55 = arith.constant 32 : index
      %c0_56 = arith.constant 0 : index
      %103 = vector.load %arg5[%c0_54, %c32_55, %c0_56] : memref<1x64x48xf32, #tpu.memory_space<vmem>>, vector<1x8x48xf32>
      %104 = vector.shape_cast %103 : vector<1x8x48xf32> to vector<8x48xf32>
      %105 = vector.shape_cast %102 : vector<8x48xf32> to vector<1x8x48xf32>
      tpu.vector_store %arg5[%c0_54, %c32_55, %c0_56], %105 {strides = array<i32>} : memref<1x64x48xf32, #tpu.memory_space<vmem>>, vector<1x8x48xf32>,
      %106 = arith.mulf %44, %51 : vector<16x48xf32>
      %c0_57 = arith.constant 0 : index
      %c40 = arith.constant 40 : index
      %c0_58 = arith.constant 0 : index
      %107 = vector.load %arg5[%c0_57, %c40, %c0_58] : memref<1x64x48xf32, #tpu.memory_space<vmem>>, vector<1x8x48xf32>
      %108 = vector.shape_cast %107 : vector<1x8x48xf32> to vector<8x48xf32>
      %109 = vector.shape_cast %106 : vector<16x48xf32> to vector<2x8x48xf32>
      %cst_59 = arith.constant dense<0.000000e+00> : vector<8x48xf32>
      %110 = vector.multi_reduction <add>, %109, %cst_59 [0] : vector<2x8x48xf32> to vector<8x48xf32>
      %111 = arith.addf %108, %110 : vector<8x48xf32>
      %c0_60 = arith.constant 0 : index
      %c40_61 = arith.constant 40 : index
      %c0_62 = arith.constant 0 : index
      %112 = vector.load %arg5[%c0_60, %c40_61, %c0_62] : memref<1x64x48xf32, #tpu.memory_space<vmem>>, vector<1x8x48xf32>
      %113 = vector.shape_cast %112 : vector<1x8x48xf32> to vector<8x48xf32>
      %114 = vector.shape_cast %111 : vector<8x48xf32> to vector<1x8x48xf32>
      tpu.vector_store %arg5[%c0_60, %c40_61, %c0_62], %114 {strides = array<i32>} : memref<1x64x48xf32, #tpu.memory_space<vmem>>, vector<1x8x48xf32>,
      %c0_63 = arith.constant 0 : index
      %c48 = arith.constant 48 : index
      %c0_64 = arith.constant 0 : index
      %115 = vector.load %arg5[%c0_63, %c48, %c0_64] : memref<1x64x48xf32, #tpu.memory_space<vmem>>, vector<1x8x48xf32>
      %116 = vector.shape_cast %115 : vector<1x8x48xf32> to vector<8x48xf32>
      %117 = vector.shape_cast %62 : vector<16x48xf32> to vector<2x8x48xf32>
      %cst_65 = arith.constant dense<0.000000e+00> : vector<8x48xf32>
      %118 = vector.multi_reduction <add>, %117, %cst_65 [0] : vector<2x8x48xf32> to vector<8x48xf32>
      %119 = arith.addf %116, %118 : vector<8x48xf32>
      %c0_66 = arith.constant 0 : index
      %c48_67 = arith.constant 48 : index
      %c0_68 = arith.constant 0 : index
      %120 = vector.load %arg5[%c0_66, %c48_67, %c0_68] : memref<1x64x48xf32, #tpu.memory_space<vmem>>, vector<1x8x48xf32>
      %121 = vector.shape_cast %120 : vector<1x8x48xf32> to vector<8x48xf32>
      %122 = vector.shape_cast %119 : vector<8x48xf32> to vector<1x8x48xf32>
      tpu.vector_store %arg5[%c0_66, %c48_67, %c0_68], %122 {strides = array<i32>} : memref<1x64x48xf32, #tpu.memory_space<vmem>>, vector<1x8x48xf32>,
      %c0_69 = arith.constant 0 : index
      %c56 = arith.constant 56 : index
      %c0_70 = arith.constant 0 : index
      %123 = vector.load %arg5[%c0_69, %c56, %c0_70] : memref<1x64x48xf32, #tpu.memory_space<vmem>>, vector<1x8x48xf32>
      %124 = vector.shape_cast %123 : vector<1x8x48xf32> to vector<8x48xf32>
      %125 = vector.shape_cast %63 : vector<16x48xf32> to vector<2x8x48xf32>
      %cst_71 = arith.constant dense<0.000000e+00> : vector<8x48xf32>
      %126 = vector.multi_reduction <add>, %125, %cst_71 [0] : vector<2x8x48xf32> to vector<8x48xf32>
      %127 = arith.addf %124, %126 : vector<8x48xf32>
      %c0_72 = arith.constant 0 : index
      %c56_73 = arith.constant 56 : index
      %c0_74 = arith.constant 0 : index
      %128 = vector.load %arg5[%c0_72, %c56_73, %c0_74] : memref<1x64x48xf32, #tpu.memory_space<vmem>>, vector<1x8x48xf32>
      %129 = vector.shape_cast %128 : vector<1x8x48xf32> to vector<8x48xf32>
      %130 = vector.shape_cast %127 : vector<8x48xf32> to vector<1x8x48xf32>
      tpu.vector_store %arg5[%c0_72, %c56_73, %c0_74], %130 {strides = array<i32>} : memref<1x64x48xf32, #tpu.memory_space<vmem>>, vector<1x8x48xf32>,
    } else {
    }
    return
  }
  func.func @transform_0(%arg0: i32, %arg1: i32) -> (i32, i32) {
    %c3_i32 = arith.constant 3 : i32
    %0 = arith.muli %arg0, %c3_i32 : i32
    %1 = arith.addi %0, %arg1 : i32
    %c2_i32 = arith.constant 2 : i32
    %2 = arith.minsi %1, %c2_i32 : i32
    %c0_i32 = arith.constant 0 : i32
    %c0_i32_0 = arith.constant 0 : i32
    return %2, %c0_i32 : i32, i32
  }
  func.func @transform_1(%arg0: i32, %arg1: i32) -> (i32, i32) {
    %c3_i32 = arith.constant 3 : i32
    %0 = arith.muli %arg0, %c3_i32 : i32
    %1 = arith.addi %0, %arg1 : i32
    %c2_i32 = arith.constant 2 : i32
    %2 = arith.minsi %1, %c2_i32 : i32
    %c0_i32 = arith.constant 0 : i32
    %c0_i32_0 = arith.constant 0 : i32
    return %2, %c0_i32 : i32, i32
  }
  func.func @transform_2(%arg0: i32, %arg1: i32) -> (i32, i32) {
    %c3_i32 = arith.constant 3 : i32
    %0 = arith.muli %arg0, %c3_i32 : i32
    %1 = arith.addi %0, %arg1 : i32
    %c2_i32 = arith.constant 2 : i32
    %2 = arith.minsi %1, %c2_i32 : i32
    %c0_i32 = arith.constant 0 : i32
    %c0_i32_0 = arith.constant 0 : i32
    return %2, %c0_i32 : i32, i32
  }
  func.func @transform_3(%arg0: i32, %arg1: i32) -> (i32, i32, i32) {
    %c0_i32 = arith.constant 0 : i32
    %c0_i32_0 = arith.constant 0 : i32
    %c0_i32_1 = arith.constant 0 : i32
    return %arg0, %c0_i32, %c0_i32_0 : i32, i32, i32
  }
}

</mosaic_0001>

<llo_original>
// kernel: tpu_custom_call.1
$region0: #{tpu_custom_call.1}
  #allocation0 [shape = 'u32[]', space=smem, size = 0x4, offset = 0x4, fixed_abs, tag = 'smem constant byte address 0x4 - core index']
  #allocation1 [shape = 'u32[144,128]{1,0:T(1,128)}', space=vmem, size = 0x12000, scoped, tag = 'internal scratch']
  %s0 = inlined_call_operand.hbm [shape: f32[43,48], index: 0, kind: input, shape index: {}]
  %s1 = inlined_call_operand.hbm [shape: f32[43,48], index: 1, kind: input, shape index: {}]
  %s2 = inlined_call_operand.hbm [shape: f32[43,48], index: 2, kind: input, shape index: {}]
  %s3 = inlined_call_operand.vmem [shape: f32[1,64,48], index: 3, kind: output, shape index: {}]
  %s4 = sld [smem:[#allocation0]]
  $region69: #{tpu_custom_call.1} parent=0
    _
  %s6 = ssub.s32 1, %s4
  %s7 = scalar_select 0, %s6, %s4
  $region1: #{tpu_custom_call.1} parent=0
    #allocation2 [shape = 'u8[16384]{0}', space=vmem, size = 0x4000, scoped, tag = 'input window, operand 0']
    #allocation3 [shape = 's32[2]{0}', space=sflag, size = 0x8, scoped, tag = 'scoped memory for tpu_custom_call.1']
    #allocation4 [shape = 'u8[16384]{0}', space=vmem, size = 0x4000, scoped, tag = 'input window, operand 1']
    #allocation5 [shape = 's32[2]{0}', space=sflag, size = 0x8, scoped, tag = 'scoped memory for tpu_custom_call.1']
    #allocation6 [shape = 'u8[16384]{0}', space=vmem, size = 0x4000, scoped, tag = 'input window, operand 2']
    %8 = vsyncpa [#allocation3], 0
    %s9 = scalar_lea.sflag [#allocation3], 1
    %10 = vsyncpa %s9, 0
    %11 = vsyncpa [#allocation5], 0
    %s12 = scalar_lea.sflag [#allocation5], 1
    %13 = vsyncpa %s12, 0
    loop: start=0, step=1, limit=5
    $region2: #{tpu_custom_call.1} parent=1 // loop_pre_header
      _
    $region3: #{tpu_custom_call.1} parent=1 // loop_header
      %s15 = sphi 0, %s19
      %p16 = scmp.ge.s32.totalorder %s15, 5
      %s22 = sphi 0, %s34
      %s23 = sphi 0, %s30
      %s24 = sphi 0, %s22
      %s25 = sphi 0, %s23
      %s26 = sphi 0, %s24
      %s27 = sphi 0, %s25
      %s45 = sphi 0, %s47
      %s48 = sphi 0, %s45
      %s49 = sphi 0, %s48
      %s65 = sphi 0, %s49
      %s79 = sphi 0, %s81
      %s82 = sphi 0, %s79
      %s83 = sphi 0, %s82
      %s99 = sphi 0, %s83
      %s113 = sphi 0, %s115
      %s116 = sphi 0, %s113
      %s117 = sphi 0, %s116
      %s133 = sphi 0, %s117
      %s139 = sphi 0, %s141
      %s142 = sphi 0, %s139
      %s143 = sphi 0, %s142
      %s159 = sphi 0, %s143
    $region4: #{tpu_custom_call.1} parent=1 // loop_header_branch
      %18 = sbr.rel (%p16) target = $region8
    $region5: #{tpu_custom_call.1} parent=1 // loop_body
      %s20 = ssub.s32 %s15, 1
      %s21 = ssub.s32 %s15, 2
      %s28 = sadd.s32 1, %s23
      %p29 = scmp.ge.s32.totalorder %s28, 3
      %s30 = scalar_select %p29, 0, %s28
      %s31 = sadd.s32 1, %s22
      %s32 = scalar_select %p29, %s31, %s22
      %p33 = scmp.ge.s32.totalorder %s32, 1
      %s34 = scalar_select %p33, 0, %s32
      %s35 = smul.u32 %s22, 3
      %s36 = sadd.s32 %s35, %s23
      %p37 = scmp.lt.s32.totalorder %s36, 2
      %s38 = scalar_select %p37, %s36, 2
      %s39 = smul.u32 %s34, 3
      %s40 = sadd.s32 %s39, %s30
      %p41 = scmp.lt.s32.totalorder %s40, 2
      %s42 = scalar_select %p41, %s40, 2
      %s43 = ssub.s32 %s38, %s42
      %p44 = scmp.eq.s32.totalorder %s43, 0
      %s46 = sadd.s32 %s45, 1
      %s47 = scalar_select %p44, %s45, %s46
      %p50 = pneg %p44
      %p51 = scmp.eq.s32.totalorder %s15, 2
      %p52 = por %p50, %p51
      %p53 = scmp.ne.s32.totalorder %s45, %s48
      %p54 = scmp.eq.s32.totalorder %s15, 0
      %p55 = por %p53, %p54
      %p56 = scmp.ne.s32.totalorder %s45, %s48
      %p57 = scmp.eq.s32.totalorder %s20, 2
      %p58 = por %p56, %p57
      %p59 = scmp.ne.s32.totalorder %s48, %s49
      %p60 = scmp.eq.s32.totalorder %s20, 0
      %p61 = por %p59, %p60
      %p62 = scmp.ne.s32.totalorder %s48, %s49
      %p63 = scmp.eq.s32.totalorder %s21, 2
      %p64 = por %p62, %p63
      %p66 = scmp.ne.s32.totalorder %s49, %s65
      %p67 = scmp.eq.s32.totalorder %s21, 0
      %p68 = por %p66, %p67
      %s69 = smul.u32 %s22, 3
      %s70 = sadd.s32 %s69, %s23
      %p71 = scmp.lt.s32.totalorder %s70, 2
      %s72 = scalar_select %p71, %s70, 2
      %s73 = smul.u32 %s34, 3
      %s74 = sadd.s32 %s73, %s30
      %p75 = scmp.lt.s32.totalorder %s74, 2
      %s76 = scalar_select %p75, %s74, 2
      %s77 = ssub.s32 %s72, %s76
      %p78 = scmp.eq.s32.totalorder %s77, 0
      %s80 = sadd.s32 %s79, 1
      %s81 = scalar_select %p78, %s79, %s80
      %p84 = pneg %p78
      %p85 = scmp.eq.s32.totalorder %s15, 2
      %p86 = por %p84, %p85
      %p87 = scmp.ne.s32.totalorder %s79, %s82
      %p88 = scmp.eq.s32.totalorder %s15, 0
      %p89 = por %p87, %p88
      %p90 = scmp.ne.s32.totalorder %s79, %s82
      %p91 = scmp.eq.s32.totalorder %s20, 2
      %p92 = por %p90, %p91
      %p93 = scmp.ne.s32.totalorder %s82, %s83
      %p94 = scmp.eq.s32.totalorder %s20, 0
      %p95 = por %p93, %p94
      %p96 = scmp.ne.s32.totalorder %s82, %s83
      %p97 = scmp.eq.s32.totalorder %s21, 2
      %p98 = por %p96, %p97
      %p100 = scmp.ne.s32.totalorder %s83, %s99
      %p101 = scmp.eq.s32.totalorder %s21, 0
      %p102 = por %p100, %p101
      %s103 = smul.u32 %s22, 3
      %s104 = sadd.s32 %s103, %s23
      %p105 = scmp.lt.s32.totalorder %s104, 2
      %s106 = scalar_select %p105, %s104, 2
      %s107 = smul.u32 %s34, 3
      %s108 = sadd.s32 %s107, %s30
      %p109 = scmp.lt.s32.totalorder %s108, 2
      %s110 = scalar_select %p109, %s108, 2
      %s111 = ssub.s32 %s106, %s110
      %p112 = scmp.eq.s32.totalorder %s111, 0
      %s114 = sadd.s32 %s113, 1
      %s115 = scalar_select %p112, %s113, %s114
      %p118 = pneg %p112
      %p119 = scmp.eq.s32.totalorder %s15, 2
      %p120 = por %p118, %p119
      %p121 = scmp.ne.s32.totalorder %s113, %s116
      %p122 = scmp.eq.s32.totalorder %s15, 0
      %p123 = por %p121, %p122
      %p124 = scmp.ne.s32.totalorder %s113, %s116
      %p125 = scmp.eq.s32.totalorder %s20, 2
      %p126 = por %p124, %p125
      %p127 = scmp.ne.s32.totalorder %s116, %s117
      %p128 = scmp.eq.s32.totalorder %s20, 0
      %p129 = por %p127, %p128
      %p130 = scmp.ne.s32.totalorder %s116, %s117
      %p131 = scmp.eq.s32.totalorder %s21, 2
      %p132 = por %p130, %p131
      %p134 = scmp.ne.s32.totalorder %s117, %s133
      %p135 = scmp.eq.s32.totalorder %s21, 0
      %p136 = por %p134, %p135
      %s137 = ssub.s32 %s22, %s34
      %p138 = scmp.eq.s32.totalorder %s137, 0
      %s140 = sadd.s32 %s139, 1
      %s141 = scalar_select %p138, %s139, %s140
      %p144 = pneg %p138
      %p145 = scmp.eq.s32.totalorder %s15, 2
      %p146 = por %p144, %p145
      %p147 = scmp.ne.s32.totalorder %s139, %s142
      %p148 = scmp.eq.s32.totalorder %s15, 0
      %p149 = por %p147, %p148
      %p150 = scmp.ne.s32.totalorder %s139, %s142
      %p151 = scmp.eq.s32.totalorder %s20, 2
      %p152 = por %p150, %p151
      %p153 = scmp.ne.s32.totalorder %s142, %s143
      %p154 = scmp.eq.s32.totalorder %s20, 0
      %p155 = por %p153, %p154
      %p156 = scmp.ne.s32.totalorder %s142, %s143
      %p157 = scmp.eq.s32.totalorder %s21, 2
      %p158 = por %p156, %p157
      %p160 = scmp.ne.s32.totalorder %s143, %s159
      %p161 = scmp.eq.s32.totalorder %s21, 0
      %p162 = por %p160, %p161
      %p163 = scmp.le.s32.totalorder 1, %s15
      %p164 = scmp.lt.s32.totalorder %s15, 4
      %p165 = pnand %p163, %p164
      %p166 = pneg %p165
      // Predicated region
      $region9: #{tpu_custom_call.1} parent=5 // pred_check
        _
      $region10: #{tpu_custom_call.1} parent=5 // pred_check_branch
        %168 = sbr.rel (%p165) target = $region12
      $region11: #{tpu_custom_call.1} parent=5 // pred_region
        %s169 = ssub.s32 %s15, 1
      $region12: #{tpu_custom_call.1} parent=5 // pred_fallthru
        _
      %p170 = scmp.lt.s32.totalorder %s15, 3
      // Predicated region
      $region13: #{tpu_custom_call.1} parent=5 // pred_check
        %p171 = pneg %p170
      $region14: #{tpu_custom_call.1} parent=5 // pred_check_branch
        %173 = sbr.rel (%p171) target = $region16
      $region15: #{tpu_custom_call.1} parent=5 // pred_region
        // Predicated region
        $region17: #{tpu_custom_call.1} parent=15 // pred_check
          %p174 = pneg %p55
        $region18: #{tpu_custom_call.1} parent=15 // pred_check_branch
          %176 = sbr.rel (%p174) target = $region20
        $region19: #{tpu_custom_call.1} parent=15 // pred_region
          %s177 = sand.u32 %s45, 1
          %s178 = scalar_lea.sflag [#allocation3], %s177
          %s179 = sand.u32 %s45, 1
          %s180 = smul.addr %s179, 16
          %s181 = scalar_lea.vmem [#allocation2], %s180
          %s182 = smul.u32 %s22, 3
          %s183 = sadd.s32 %s182, %s23
          %p184 = scmp.lt.s32.totalorder %s183, 2
          %s185 = scalar_select %p184, %s183, 2
          %s186 = smul.u32 2, %s185
          %s188 = ssub.s32 256, 256
          %189 = vsyncadd %s178, %s188
          %s190 = smul.addr %s186, 128
          %s191 = scalar_lea.hbm %s0, %s190
          %s192 = sshll.u32 %s181, 4
          %s193 = int_to_ptr.vmem [resolvable:$true] %s192
          %198 = dma.hbm_to_vmem [thread:$0]  %s191, 256, %s193, %s178, 128, 128, 8
        $region20: #{tpu_custom_call.1} parent=15 // pred_fallthru
          _
        // Predicated region
        $region21: #{tpu_custom_call.1} parent=15 // pred_check
          %p199 = pneg %p89
        $region22: #{tpu_custom_call.1} parent=15 // pred_check_branch
          %201 = sbr.rel (%p199) target = $region24
        $region23: #{tpu_custom_call.1} parent=15 // pred_region
          %s202 = sand.u32 %s15, 1
          %s203 = scalar_lea.sflag [#allocation5], %s202
          %s204 = sand.u32 %s79, 1
          %s205 = smul.addr %s204, 16
          %s206 = scalar_lea.vmem [#allocation4], %s205
          %s207 = smul.u32 %s22, 3
          %s208 = sadd.s32 %s207, %s23
          %p209 = scmp.lt.s32.totalorder %s208, 2
          %s210 = scalar_select %p209, %s208, 2
          %s211 = smul.u32 2, %s210
          %s213 = ssub.s32 256, 256
          %214 = vsyncadd %s203, %s213
          %s215 = smul.addr %s211, 128
          %s216 = scalar_lea.hbm %s1, %s215
          %s217 = sshll.u32 %s206, 4
          %s218 = int_to_ptr.vmem [resolvable:$true] %s217
          %223 = dma.hbm_to_vmem [thread:$0]  %s216, 256, %s218, %s203, 128, 128, 8
        $region24: #{tpu_custom_call.1} parent=15 // pred_fallthru
          _
        // Predicated region
        $region25: #{tpu_custom_call.1} parent=15 // pred_check
          %p224 = pneg %p123
        $region26: #{tpu_custom_call.1} parent=15 // pred_check_branch
          %226 = sbr.rel (%p224) target = $region28
        $region27: #{tpu_custom_call.1} parent=15 // pred_region
          %s227 = sand.u32 %s15, 1
          %s228 = scalar_lea.sflag [#allocation5], %s227
          %s229 = sand.u32 %s113, 1
          %s230 = smul.addr %s229, 16
          %s231 = scalar_lea.vmem [#allocation6], %s230
          %s232 = smul.u32 %s22, 3
          %s233 = sadd.s32 %s232, %s23
          %p234 = scmp.lt.s32.totalorder %s233, 2
          %s235 = scalar_select %p234, %s233, 2
          %s236 = smul.u32 2, %s235
          %s238 = ssub.s32 256, 256
          %239 = vsyncadd %s228, %s238
          %s240 = smul.addr %s236, 128
          %s241 = scalar_lea.hbm %s2, %s240
          %s242 = sshll.u32 %s231, 4
          %s243 = int_to_ptr.vmem [resolvable:$true] %s242
          %248 = dma.hbm_to_vmem [thread:$0]  %s241, 256, %s243, %s228, 128, 128, 8
        $region28: #{tpu_custom_call.1} parent=15 // pred_fallthru
          _
      $region16: #{tpu_custom_call.1} parent=5 // pred_fallthru
        _
      %p249 = scmp.le.s32.totalorder 1, %s15
      %p250 = scmp.lt.s32.totalorder %s15, 4
      %p251 = pnand %p249, %p250
      %p252 = pneg %p251
      // Predicated region
      $region29: #{tpu_custom_call.1} parent=5 // pred_check
        _
      $region30: #{tpu_custom_call.1} parent=5 // pred_check_branch
        %254 = sbr.rel (%p251) target = $region32
      $region31: #{tpu_custom_call.1} parent=5 // pred_region
        %s255 = ssub.s32 %s15, 1
        %s256 = sand.u32 %s48, 1
        %s257 = scalar_lea.sflag [#allocation3], %s256
        %s258 = sand.u32 %s48, 1
        %s259 = smul.addr %s258, 16
        %s260 = scalar_lea.vmem [#allocation2], %s259
        // Predicated region
        $region33: #{tpu_custom_call.1} parent=31 // pred_check
          %p261 = pneg %p61
        $region34: #{tpu_custom_call.1} parent=31 // pred_check_branch
          %263 = sbr.rel (%p261) target = $region36
        $region35: #{tpu_custom_call.1} parent=31 // pred_region
          %264 = dma.done %s257, 256
        $region36: #{tpu_custom_call.1} parent=31 // pred_fallthru
          _
        %s265 = sand.u32 %s20, 1
        %s266 = scalar_lea.sflag [#allocation5], %s265
        %s267 = sand.u32 %s82, 1
        %s268 = smul.addr %s267, 16
        %s269 = scalar_lea.vmem [#allocation4], %s268
        // Predicated region
        $region37: #{tpu_custom_call.1} parent=31 // pred_check
          %p270 = pneg %p95
        $region38: #{tpu_custom_call.1} parent=31 // pred_check_branch
          %272 = sbr.rel (%p270) target = $region40
        $region39: #{tpu_custom_call.1} parent=31 // pred_region
          %273 = dma.done %s266, 256
        $region40: #{tpu_custom_call.1} parent=31 // pred_fallthru
          _
        %s274 = sand.u32 %s20, 1
        %s275 = scalar_lea.sflag [#allocation5], %s274
        %s276 = sand.u32 %s116, 1
        %s277 = smul.addr %s276, 16
        %s278 = scalar_lea.vmem [#allocation6], %s277
        // Predicated region
        $region41: #{tpu_custom_call.1} parent=31 // pred_check
          %p279 = pneg %p129
        $region42: #{tpu_custom_call.1} parent=31 // pred_check_branch
          %281 = sbr.rel (%p279) target = $region44
        $region43: #{tpu_custom_call.1} parent=31 // pred_region
          %282 = dma.done %s275, 256
        $region44: #{tpu_custom_call.1} parent=31 // pred_fallthru
          _
        %s283 = sand.u32 %s48, 1
        %s284 = scalar_lea.sflag [#allocation3], %s283
        %s285 = sand.u32 %s48, 1
        %s286 = smul.addr %s285, 16
        %s287 = scalar_lea.vmem [#allocation2], %s286
        %p288 = pneg %p61
        %p289 = pneg %p58
        %s290 = sand.u32 %s20, 1
        %s291 = scalar_lea.sflag [#allocation5], %s290
        %s292 = sand.u32 %s82, 1
        %s293 = smul.addr %s292, 16
        %s294 = scalar_lea.vmem [#allocation4], %s293
        %p295 = pneg %p95
        %p296 = pneg %p92
        %s297 = sand.u32 %s20, 1
        %s298 = scalar_lea.sflag [#allocation5], %s297
        %s299 = sand.u32 %s116, 1
        %s300 = smul.addr %s299, 16
        %s301 = scalar_lea.vmem [#allocation6], %s300
        %p302 = pneg %p129
        %p303 = pneg %p126
        %p304 = pneg %p155
        %p305 = pneg %p152
        %p306 = scmp.lt.s32.totalorder %s24, 0
        %s307 = scalar_select %p306, %s24, 0
        %s308 = smul.addr %s307, 8
        %s309 = smul.addr %s308, 8
        %s310 = scalar_lea.vmem %s3, %s309
        %s311 = smul.u32 %s24, 3
        %s312 = sadd.s32 %s311, %s25
        %p313 = scmp.lt.s32.totalorder %s312, 2
        %s314 = scalar_select %p313, %s312, 2
        %s315 = smul.u32 2, %s314
        %s316 = smul.u32 %s24, 3
        %s317 = sadd.s32 %s316, %s25
        %p318 = scmp.lt.s32.totalorder %s317, 2
        %s319 = scalar_select %p318, %s317, 2
        %s320 = smul.u32 2, %s319
        %s321 = smul.u32 %s24, 3
        %s322 = sadd.s32 %s321, %s25
        %p323 = scmp.lt.s32.totalorder %s322, 2
        %s324 = scalar_select %p323, %s322, 2
        %s325 = smul.u32 2, %s324
        %p326 = scmp.lt.s32.totalorder %s24, 0
        %s327 = scalar_select %p326, %s24, 0
        %s328 = smul.addr %s327, 8
        %s329 = smul.addr %s328, 8
        %s330 = scalar_lea.vmem %s3, %s329
        %p331 = scmp.eq.s32.totalorder %s25, 0
        // Predicated region
        $region45: #{tpu_custom_call.1} parent=31 // pred_check
          %p332 = pneg %p331
        $region46: #{tpu_custom_call.1} parent=31 // pred_check_branch
          %334 = sbr.rel (%p332) target = $region48
        $region47: #{tpu_custom_call.1} parent=31 // pred_region
          %vm335 = vcmask 392192
          %336 = vst.msk [vmem:[%s330] sm:$0xff] %vm335, 0.0
          %337 = vst.msk [vmem:[%s330 + $0x8] sm:$0xff] %vm335, 0.0
          %338 = vst.msk [vmem:[%s330 + $0x10] sm:$0xff] %vm335, 0.0
          %339 = vst.msk [vmem:[%s330 + $0x18] sm:$0xff] %vm335, 0.0
          %340 = vst.msk [vmem:[%s330 + $0x20] sm:$0xff] %vm335, 0.0
          %341 = vst.msk [vmem:[%s330 + $0x28] sm:$0xff] %vm335, 0.0
          %342 = vst.msk [vmem:[%s330 + $0x30] sm:$0xff] %vm335, 0.0
          %343 = vst.msk [vmem:[%s330 + $0x38] sm:$0xff] %vm335, 0.0
        $region48: #{tpu_custom_call.1} parent=31 // pred_fallthru
          _
        %s344 = smul.u32 %s24, 3
        %s345 = sadd.s32 %s344, %s25
        %s346 = smul.u32 %s345, 16
        %s347 = sadd.s32 %s346, 16
        %p348 = scmp.le.s32.totalorder %s347, 43
        // Predicated region
        $region49: #{tpu_custom_call.1} parent=31 // pred_check
          %p349 = pneg %p348
        $region50: #{tpu_custom_call.1} parent=31 // pred_check_branch
          %351 = sbr.rel (%p349) target = $region52
        $region51: #{tpu_custom_call.1} parent=31 // pred_region
          %v352 = vld [vmem:[%s260] sm:$0xff]
          %v353 = vld [vmem:[%s260 + $0x8] sm:$0xff]
          %v354 = vld [vmem:[%s269] sm:$0xff]
          %v355 = vld [vmem:[%s269 + $0x8] sm:$0xff]
          %v356 = vld [vmem:[%s278] sm:$0xff]
          %v357 = vld [vmem:[%s278 + $0x8] sm:$0xff]
          %vm358 = vweird.f32 %v352
          %vm359 = vweird.f32 %v353
          %vm360 = vmxor %vm358, 1
          %vm361 = vmxor %vm359, 1
          %v362 = vsel %vm360, %v352, 0.0
          %v363 = vsel %vm361, %v353, 0.0
          %v364 = vmax.f32 %v362, 0.0
          %v365 = vmax.f32 %v363, 0.0
          %v366 = vmin.f32 %v364, 10000.0
          %v367 = vmin.f32 %v365, 10000.0
          %v368 = vmax.f32 %v356, 0.0
          %v369 = vmax.f32 %v357, 0.0
          %v370 = vmin.f32 %v368, 1.0
          %v371 = vmin.f32 %v369, 1.0
          %vm372 = vcmp.gt.f32.partialorder %v366, 0.0
          %vm373 = vcmp.gt.f32.partialorder %v367, 0.0
          %v374 = vsel %vm372, 1, 0
          %v375 = vsel %vm373, 1, 0
          %v376 = vcvt.s32.f32 %v374
          %v377 = vcvt.s32.f32 %v375
          %v378 = vadd.f32 %v366, 1e-06
          %v379 = vadd.f32 %v367, 1e-06
          %v380 = vlog2.pop %v378
          %v381 = vmul.f32 %v380, 0.6931472
          %v382 = vlog2.pop %v379
          %v383 = vmul.f32 %v382, 0.6931472
          %v384 = vsel %vm372, %v381, 0.0
          %v385 = vsel %vm373, %v383, 0.0
          %v386 = vmax.f32 %v354, 0.0
          %v387 = vmax.f32 %v355, 0.0
          %v388 = vadd.f32 %v386, 1e-06
          %v389 = vadd.f32 %v387, 1e-06
          %v390 = vlog2.pop %v388
          %v391 = vmul.f32 %v390, 0.6931472
          %v392 = vlog2.pop %v389
          %v393 = vmul.f32 %v392, 0.6931472
          %v394 = vsel %vm372, %v391, 0.0
          %v395 = vsel %vm373, %v393, 0.0
          %v396 = vsub.f32 1.0, %v370
          %v397 = vsub.f32 1.0, %v371
          %v398 = vsel %vm372, %v370, %v396
          %v399 = vsel %vm373, %v371, %v397
          %v400 = vlog2.pop %v398
          %v401 = vmul.f32 %v400, 0.6931472
          %v402 = vlog2.pop %v399
          %v403 = vmul.f32 %v402, 0.6931472
          %v404 = vmax.f32 %v401, -100.0
          %v405 = vmax.f32 %v403, -100.0
          %v406 = vsub.f32 0.0, %v404
          %v407 = vsub.f32 0.0, %v405
          %v408 = vsub.f32 1.0, %v376
          %v409 = vsub.f32 1.0, %v377
          %v410 = vmul.f32 %v408, %v406
          %v411 = vmul.f32 %v409, %v407
          %v412 = vmul.f32 %v376, %v406
          %v413 = vmul.f32 %v377, %v407
          %v414 = vld [vmem:[%s330] sm:$0xff]
          %vm415 = vcmask 392192
          %v416 = vsel %vm415, %v376, 0.0
          %v417 = vsel %vm415, %v377, 0.0
          %v418 = vadd.f32 %v416, %v417
          %v419 = vadd.f32 %v414, %v418
          %420 = vst.msk [vmem:[%s330] sm:$0xff] %vm415, %v419
          %v421 = vld [vmem:[%s330 + $0x8] sm:$0xff]
          %v422 = vsel %vm415, %v384, 0.0
          %v423 = vsel %vm415, %v385, 0.0
          %v424 = vadd.f32 %v422, %v423
          %v425 = vadd.f32 %v421, %v424
          %426 = vst.msk [vmem:[%s330 + $0x8] sm:$0xff] %vm415, %v425
          %v427 = vld [vmem:[%s330 + $0x10] sm:$0xff]
          %v428 = vsel %vm415, %v394, 0.0
          %v429 = vsel %vm415, %v395, 0.0
          %v430 = vadd.f32 %v428, %v429
          %v431 = vadd.f32 %v427, %v430
          %432 = vst.msk [vmem:[%s330 + $0x10] sm:$0xff] %vm415, %v431
          %v433 = vmul.f32 %v384, %v384
          %v434 = vmul.f32 %v385, %v385
          %v435 = vld [vmem:[%s330 + $0x18] sm:$0xff]
          %v436 = vsel %vm415, %v433, 0.0
          %v437 = vsel %vm415, %v434, 0.0
          %v438 = vadd.f32 %v436, %v437
          %v439 = vadd.f32 %v435, %v438
          %440 = vst.msk [vmem:[%s330 + $0x18] sm:$0xff] %vm415, %v439
          %v441 = vmul.f32 %v394, %v394
          %v442 = vmul.f32 %v395, %v395
          %v443 = vld [vmem:[%s330 + $0x20] sm:$0xff]
          %v444 = vsel %vm415, %v441, 0.0
          %v445 = vsel %vm415, %v442, 0.0
          %v446 = vadd.f32 %v444, %v445
          %v447 = vadd.f32 %v443, %v446
          %448 = vst.msk [vmem:[%s330 + $0x20] sm:$0xff] %vm415, %v447
          %v449 = vmul.f32 %v384, %v394
          %v450 = vmul.f32 %v385, %v395
          %v451 = vld [vmem:[%s330 + $0x28] sm:$0xff]
          %v452 = vsel %vm415, %v449, 0.0
          %v453 = vsel %vm415, %v450, 0.0
          %v454 = vadd.f32 %v452, %v453
          %v455 = vadd.f32 %v451, %v454
          %456 = vst.msk [vmem:[%s330 + $0x28] sm:$0xff] %vm415, %v455
          %v457 = vld [vmem:[%s330 + $0x30] sm:$0xff]
          %v458 = vsel %vm415, %v410, 0.0
          %v459 = vsel %vm415, %v411, 0.0
          %v460 = vadd.f32 %v458, %v459
          %v461 = vadd.f32 %v457, %v460
          %462 = vst.msk [vmem:[%s330 + $0x30] sm:$0xff] %vm415, %v461
          %v463 = vld [vmem:[%s330 + $0x38] sm:$0xff]
          %v464 = vsel %vm415, %v412, 0.0
          %v465 = vsel %vm415, %v413, 0.0
          %v466 = vadd.f32 %v464, %v465
          %v467 = vadd.f32 %v463, %v466
          %468 = vst.msk [vmem:[%s330 + $0x38] sm:$0xff] %vm415, %v467
        $region52: #{tpu_custom_call.1} parent=31 // pred_fallthru
          _
        %p469 = scmp.gt.s32.totalorder %s347, 43
        // Predicated region
        $region53: #{tpu_custom_call.1} parent=31 // pred_check
          %p470 = pneg %p469
        $region54: #{tpu_custom_call.1} parent=31 // pred_check_branch
          %472 = sbr.rel (%p470) target = $region56
        $region55: #{tpu_custom_call.1} parent=31 // pred_region
          %v473 = vld [vmem:[%s260] sm:$0xff]
          %v474 = vld [vmem:[%s260 + $0x8] sm:$0xff]
          %v475 = vld [vmem:[%s269] sm:$0xff]
          %v476 = vld [vmem:[%s269 + $0x8] sm:$0xff]
          %v477 = vld [vmem:[%s278] sm:$0xff]
          %v478 = vld [vmem:[%s278 + $0x8] sm:$0xff]
          %vm479 = vweird.f32 %v473
          %vm480 = vweird.f32 %v474
          %vm481 = vmxor %vm479, 1
          %vm482 = vmxor %vm480, 1
          %v483 = vlaneseq
          %v484 = vshrl.u32 %v483, 7
          %v485 = vadd.s32 %v484, 8
          %v486 = vstv %s346
          %v487 = vadd.s32 %v486, %v484
          %v488 = vadd.s32 %v486, %v485
          %vm489 = vcmp.lt.s32.totalorder %v487, 43
          %vm490 = vcmp.lt.s32.totalorder %v488, 43
          %vm491 = vmand %vm481, %vm489
          %vm492 = vmand %vm482, %vm490
          %v493 = vsel %vm489, %v477, 0.0
          %v494 = vsel %vm490, %v478, 0.0
          %v495 = vsel %vm491, %v473, 0.0
          %v496 = vsel %vm492, %v474, 0.0
          %v497 = vmax.f32 %v495, 0.0
          %v498 = vmax.f32 %v496, 0.0
          %v499 = vmin.f32 %v497, 10000.0
          %v500 = vmin.f32 %v498, 10000.0
          %v501 = vmax.f32 %v493, 0.0
          %v502 = vmax.f32 %v494, 0.0
          %v503 = vmin.f32 %v501, 1.0
          %v504 = vmin.f32 %v502, 1.0
          %vm505 = vcmp.gt.f32.partialorder %v499, 0.0
          %vm506 = vcmp.gt.f32.partialorder %v500, 0.0
          %v507 = vsel %vm505, 1, 0
          %v508 = vsel %vm506, 1, 0
          %v509 = vcvt.s32.f32 %v507
          %v510 = vcvt.s32.f32 %v508
          %v511 = vadd.f32 %v499, 1e-06
          %v512 = vadd.f32 %v500, 1e-06
          %v513 = vlog2.pop %v511
          %v514 = vmul.f32 %v513, 0.6931472
          %v515 = vlog2.pop %v512
          %v516 = vmul.f32 %v515, 0.6931472
          %v517 = vsel %vm505, %v514, 0.0
          %v518 = vsel %vm506, %v516, 0.0
          %v519 = vmax.f32 %v475, 0.0
          %v520 = vmax.f32 %v476, 0.0
          %v521 = vadd.f32 %v519, 1e-06
          %v522 = vadd.f32 %v520, 1e-06
          %v523 = vlog2.pop %v521
          %v524 = vmul.f32 %v523, 0.6931472
          %v525 = vlog2.pop %v522
          %v526 = vmul.f32 %v525, 0.6931472
          %v527 = vsel %vm505, %v524, 0.0
          %v528 = vsel %vm506, %v526, 0.0
          %v529 = vsub.f32 1.0, %v503
          %v530 = vsub.f32 1.0, %v504
          %v531 = vsel %vm505, %v503, %v529
          %v532 = vsel %vm506, %v504, %v530
          %v533 = vlog2.pop %v531
          %v534 = vmul.f32 %v533, 0.6931472
          %v535 = vlog2.pop %v532
          %v536 = vmul.f32 %v535, 0.6931472
          %v537 = vmax.f32 %v534, -100.0
          %v538 = vmax.f32 %v536, -100.0
          %v539 = vsub.f32 0.0, %v537
          %v540 = vsub.f32 0.0, %v538
          %v541 = vsub.f32 1.0, %v509
          %v542 = vsub.f32 1.0, %v510
          %v543 = vmul.f32 %v541, %v539
          %v544 = vmul.f32 %v542, %v540
          %v545 = vmul.f32 %v509, %v539
          %v546 = vmul.f32 %v510, %v540
          %v547 = vld [vmem:[%s330] sm:$0xff]
          %vm548 = vcmask 392192
          %v549 = vsel %vm548, %v509, 0.0
          %v550 = vsel %vm548, %v510, 0.0
          %v551 = vadd.f32 %v549, %v550
          %v552 = vadd.f32 %v547, %v551
          %553 = vst.msk [vmem:[%s330] sm:$0xff] %vm548, %v552
          %v554 = vld [vmem:[%s330 + $0x8] sm:$0xff]
          %v555 = vsel %vm548, %v517, 0.0
          %v556 = vsel %vm548, %v518, 0.0
          %v557 = vadd.f32 %v555, %v556
          %v558 = vadd.f32 %v554, %v557
          %559 = vst.msk [vmem:[%s330 + $0x8] sm:$0xff] %vm548, %v558
          %v560 = vld [vmem:[%s330 + $0x10] sm:$0xff]
          %v561 = vsel %vm548, %v527, 0.0
          %v562 = vsel %vm548, %v528, 0.0
          %v563 = vadd.f32 %v561, %v562
          %v564 = vadd.f32 %v560, %v563
          %565 = vst.msk [vmem:[%s330 + $0x10] sm:$0xff] %vm548, %v564
          %v566 = vmul.f32 %v517, %v517
          %v567 = vmul.f32 %v518, %v518
          %v568 = vld [vmem:[%s330 + $0x18] sm:$0xff]
          %v569 = vsel %vm548, %v566, 0.0
          %v570 = vsel %vm548, %v567, 0.0
          %v571 = vadd.f32 %v569, %v570
          %v572 = vadd.f32 %v568, %v571
          %573 = vst.msk [vmem:[%s330 + $0x18] sm:$0xff] %vm548, %v572
          %v574 = vmul.f32 %v527, %v527
          %v575 = vmul.f32 %v528, %v528
          %v576 = vld [vmem:[%s330 + $0x20] sm:$0xff]
          %v577 = vsel %vm548, %v574, 0.0
          %v578 = vsel %vm548, %v575, 0.0
          %v579 = vadd.f32 %v577, %v578
          %v580 = vadd.f32 %v576, %v579
          %581 = vst.msk [vmem:[%s330 + $0x20] sm:$0xff] %vm548, %v580
          %v582 = vmul.f32 %v517, %v527
          %v583 = vmul.f32 %v518, %v528
          %v584 = vld [vmem:[%s330 + $0x28] sm:$0xff]
          %v585 = vsel %vm548, %v582, 0.0
          %v586 = vsel %vm548, %v583, 0.0
          %v587 = vadd.f32 %v585, %v586
          %v588 = vadd.f32 %v584, %v587
          %589 = vst.msk [vmem:[%s330 + $0x28] sm:$0xff] %vm548, %v588
          %v590 = vld [vmem:[%s330 + $0x30] sm:$0xff]
          %v591 = vsel %vm548, %v543, 0.0
          %v592 = vsel %vm548, %v544, 0.0
          %v593 = vadd.f32 %v591, %v592
          %v594 = vadd.f32 %v590, %v593
          %595 = vst.msk [vmem:[%s330 + $0x30] sm:$0xff] %vm548, %v594
          %v596 = vld [vmem:[%s330 + $0x38] sm:$0xff]
          %v597 = vsel %vm548, %v545, 0.0
          %v598 = vsel %vm548, %v546, 0.0
          %v599 = vadd.f32 %v597, %v598
          %v600 = vadd.f32 %v596, %v599
          %601 = vst.msk [vmem:[%s330 + $0x38] sm:$0xff] %vm548, %v600
        $region56: #{tpu_custom_call.1} parent=31 // pred_fallthru
          _
        %p602 = scmp.lt.s32.totalorder %s24, 0
        %s603 = scalar_select %p602, %s24, 0
        %s604 = smul.addr %s603, 8
        %s605 = smul.addr %s604, 8
        %s606 = scalar_lea.vmem %s3, %s605
        // Predicated region
        $region57: #{tpu_custom_call.1} parent=31 // pred_check
          %p607 = pneg %p152
        $region58: #{tpu_custom_call.1} parent=31 // pred_check_branch
          %609 = sbr.rel (%p607) target = $region60
        $region59: #{tpu_custom_call.1} parent=31 // pred_region
          _
        $region60: #{tpu_custom_call.1} parent=31 // pred_fallthru
          _
        // Predicated region
        $region61: #{tpu_custom_call.1} parent=31 // pred_check
          %p610 = pneg %p152
        $region62: #{tpu_custom_call.1} parent=31 // pred_check_branch
          %612 = sbr.rel (%p610) target = $region64
        $region63: #{tpu_custom_call.1} parent=31 // pred_region
          %p613 = scmp.lt.s32.totalorder %s24, 0
          %s614 = scalar_select %p613, %s24, 0
          %s615 = smul.addr %s614, 8
          %s616 = smul.addr %s615, 8
          %s617 = scalar_lea.vmem %s3, %s616
        $region64: #{tpu_custom_call.1} parent=31 // pred_fallthru
          _
      $region32: #{tpu_custom_call.1} parent=5 // pred_fallthru
        _
      %p618 = scmp.le.s32.totalorder 2, %s15
      // Predicated region
      $region65: #{tpu_custom_call.1} parent=5 // pred_check
        %p619 = pneg %p618
      $region66: #{tpu_custom_call.1} parent=5 // pred_check_branch
        %621 = sbr.rel (%p619) target = $region68
      $region67: #{tpu_custom_call.1} parent=5 // pred_region
        %s622 = ssub.s32 %s15, 2
      $region68: #{tpu_custom_call.1} parent=5 // pred_fallthru
        _
    $region6: #{tpu_custom_call.1} parent=1 // loop_footer
      %s19 = sadd.s32 1, %s15
    $region7: #{tpu_custom_call.1} parent=1 // loop_footer_branch
      %14 = sbr.rel target = $region3
    $region8: #{tpu_custom_call.1} parent=1 // loop_exit
      _
    %623 = vsyncpa [#allocation3], 1
    %s624 = scalar_lea.sflag [#allocation3], 1
    %625 = vsyncpa %s624, 1
    %626 = vsyncpa [#allocation5], 1
    %s627 = scalar_lea.sflag [#allocation5], 1
    %628 = vsyncpa %s627, 1

</llo_original>
